<compile_context>
chip_gen: v7x
topology: tpu7x:2x2x1
jax: 0.10.0
libtpu: 0.0.40
codegen_flags: <defaults>
</compile_context>

<pallas_src>
import itertools
import functools

import jax
import jax.numpy as jnp
from jax.experimental import pallas as pl
from jax.experimental.pallas import tpu as pltpu


# --------------------------------------------------------------------------------------
# Pallas kernels: K-tiled matmul (+ optional fused residual 1x1 conv) + bias + ReLU
# --------------------------------------------------------------------------------------
def _mm_bias_relu_kernel(a_ref, w_ref, b_ref, o_ref, acc_ref):
    # a_ref: [tn, tk] bf16   w_ref: [tk, Cp] bf16   b_ref: [1, Cp] f32   acc_ref: [tn, Cp] f32
    @pl.when(pl.program_id(1) == 0)
    def _():
        acc_ref[...] = jnp.zeros_like(acc_ref)

    acc_ref[...] += jnp.dot(a_ref[...], w_ref[...], preferred_element_type=jnp.float32)

    @pl.when(pl.program_id(1) == pl.num_programs(1) - 1)
    def _():
        o_ref[...] = jnp.maximum(acc_ref[...] + b_ref[...], 0.0).astype(o_ref.dtype)


def _mm_residual_bias_relu_kernel(a_ref, w_ref, x_ref, wd_ref, b_ref, o_ref, acc_ref):
    # Residual/downsample path (x @ wd) initializes the accumulator at k==0; then the
    # main-branch contraction chunks accumulate on top; final ReLU(acc + (b2+bd)).
    @pl.when(pl.program_id(1) == 0)
    def _():
        acc_ref[...] = jnp.dot(x_ref[...], wd_ref[...], preferred_element_type=jnp.float32)

    acc_ref[...] += jnp.dot(a_ref[...], w_ref[...], preferred_element_type=jnp.float32)

    @pl.when(pl.program_id(1) == pl.num_programs(1) - 1)
    def _():
        o_ref[...] = jnp.maximum(acc_ref[...] + b_ref[...], 0.0).astype(o_ref.dtype)


def conv_matmul(a, w, bias, *, out_dtype, tn, tk, vmem_limit_bytes, residual=None):
    """y = relu(a @ w + bias [+ x @ wd]) with a K-tiled contraction and f32 accumulator."""
    n_pad, kdim_pad = a.shape
    cout_pad = w.shape[1]
    assert n_pad % tn == 0 and kdim_pad % tk == 0, "caller must pad to tile multiples"
    grid = (n_pad // tn, kdim_pad // tk)

    a_spec = pl.BlockSpec((tn, tk), lambda i, k: (i, k))          # streamed slab chunk
    w_spec = pl.BlockSpec((tk, cout_pad), lambda i, k: (k, 0))    # streamed weight chunk
    b_spec = pl.BlockSpec((1, cout_pad), lambda i, k: (0, 0))     # resident bias
    o_spec = pl.BlockSpec((tn, cout_pad), lambda i, k: (i, 0))    # resident over k (written at last k)
    scratch = [pltpu.VMEM((tn, cout_pad), jnp.float32)]
    cp = pltpu.CompilerParams(
        # row axis parallel -> shards across the two TensorCores on v7x; contraction axis
        # is a carried accumulation -> arbitrary.
        dimension_semantics=("parallel", "arbitrary"),
        vmem_limit_bytes=vmem_limit_bytes,
    )
    out_shape = jax.ShapeDtypeStruct((n_pad, cout_pad), out_dtype)

    if residual is None:
        return pl.pallas_call(
            _mm_bias_relu_kernel, out_shape=out_shape, grid=grid,
            in_specs=[a_spec, w_spec, b_spec], out_specs=o_spec,
            scratch_shapes=scratch, compiler_params=cp,
        )(a, w, bias)

    x, wd = residual
    cres = x.shape[1]
    x_spec = pl.BlockSpec((tn, cres), lambda i, k: (i, 0))        # resident over k
    wd_spec = pl.BlockSpec((cres, cout_pad), lambda i, k: (0, 0))  # resident
    return pl.pallas_call(
        _mm_residual_bias_relu_kernel, out_shape=out_shape, grid=grid,
        in_specs=[a_spec, w_spec, x_spec, wd_spec, b_spec], out_specs=o_spec,
        scratch_shapes=scratch, compiler_params=cp,
    )(a, w, x, wd, bias)


# --------------------------------------------------------------------------------------
# Sparse-conv glue (plain JAX): kernel map + im2col gather + BN folding
# --------------------------------------------------------------------------------------
def build_kernel_map(coords, ks=3, dilation=1):
    """[K, N] neighbor indices (value N == missing) via sorted-key lookup, O(K N log N).
    Assumes unique voxel coordinates (true for voxelized sparse tensors)."""
    n = coords.shape[0]
    r = ks // 2
    offs = jnp.array(
        list(itertools.product(range(-r, r + 1), repeat=3)), dtype=jnp.int32
    ) * dilation                                                  # [K, 3]
    shift = coords.min(axis=0) - r * dilation
    c0 = coords - shift                                           # every target coord >= 0
    spans = c0.max(axis=0) + r * dilation + 1                     # per-axis key spans (int32)

    def key(c):
        return (c[..., 0] * spans[1] + c[..., 1]) * spans[2] + c[..., 2]

    pkey = key(c0)                                                # [N]
    order = jnp.argsort(pkey)
    skey = pkey[order]
    tkey = key(c0[None, :, :] + offs[:, None, :])                 # [K, N]
    pos = jnp.searchsorted(skey, tkey)
    posc = jnp.clip(pos, 0, n - 1)
    found = skey[posc] == tkey
    return jnp.where(found, order[posc], n)                       # [K, N]


def _extend_offsets(nbr_t, c, kdim_pad, sentinel):
    """Append 'virtual' kernel offsets that point at the zero row so the gathered slab is
    already kdim_pad wide (avoids a second full-slab jnp.pad pass)."""
    _, k = nbr_t.shape
    extra = (kdim_pad - k * c) // c
    if extra > 0:
        nbr_t = jnp.pad(nbr_t, ((0, 0), (0, extra)), constant_values=sentinel)
    return nbr_t


def gather_slab(src, nbr_t, kdim_pad):
    """src [M, C]; nbr_t [n_pad, K_ext] with indices in [0, M] (index M == zero row).
    Returns the im2col slab [n_pad, kdim_pad] (zeros for missing neighbors / padding)."""
    m, c = src.shape
    n_rows, k_ext = nbr_t.shape
    src_z = jnp.concatenate([src, jnp.zeros((1, c), src.dtype)], axis=0)
    slab = src_z[nbr_t].reshape(n_rows, k_ext * c)                # [n_pad, K_ext*C] directly
    pad = kdim_pad - k_ext * c
    if pad > 0:                                                   # only when C does not divide pad
        slab = jnp.pad(slab, ((0, 0), (0, pad)))
    return slab


def fold_bn(gamma, beta, running_mean, running_var, eps=1e-5):
    scale = gamma / jnp.sqrt(running_var + eps)
    bias = beta - running_mean * scale
    return scale.reshape(1, -1), bias.reshape(1, -1)


def _round_up(x, m):
    return (x + m - 1) // m * m


def _default_tiles():
    """Generation-aware defaults: v7x has 64 MiB physical VMEM shared by 2 TCs."""
    kind = ""
    try:
        kind = jax.devices()[0].device_kind.lower()
    except Exception:
        pass
    if "v7" in kind or "7x" in kind:
        return dict(tn=256, tk=512, vmem_limit_bytes=32 * 1024 * 1024)
    return dict(tn=512, tk=512, vmem_limit_bytes=64 * 1024 * 1024)


# --------------------------------------------------------------------------------------
# One-time parameter preparation (BN fold, padding, bf16 cast) -- off the hot path
# --------------------------------------------------------------------------------------
def prepare_residual_block(params, *, cin, cout, ks=3, tn=None, tk=None,
                           lane_align=128, vmem_limit_bytes=None):
    d = _default_tiles()
    tn = d["tn"] if tn is None else tn
    tk = d["tk"] if tk is None else tk
    vmem_limit_bytes = d["vmem_limit_bytes"] if vmem_limit_bytes is None else vmem_limit_bytes

    K = ks ** 3
    # narrow output channels: keep unpadded (full-dim block) instead of wasting 128 lanes
    cout_pad = cout if cout <= 64 else _round_up(cout, lane_align)
    cin_pad = _round_up(cin, lane_align)          # residual/downsample input (cheap, lane-dense)

    k1 = K * cin
    tk1 = min(tk, _round_up(k1, 128))
    k1_pad = _round_up(k1, tk1)
    k2 = K * cout_pad                              # stage-2 gathers h1 with cout_pad channels
    tk2 = min(tk, _round_up(k2, 128))
    k2_pad = _round_up(k2, tk2)

    s1, b1 = fold_bn(*params["bn1"])
    s2, b2 = fold_bn(*params["bn2"])
    sd, bd = fold_bn(*params["bnd"])

    w1f = params["w1"] * s1                                        # [K, cin, cout]
    w2f = params["w2"] * s2                                        # [K, cout, cout]
    wdf = params["wd"] * sd                                        # [cin, cout]

    w1p = jnp.pad(w1f, ((0, 0), (0, 0), (0, cout_pad - cout))).reshape(k1, cout_pad)
    w1p = jnp.pad(w1p, ((0, k1_pad - k1), (0, 0))).astype(jnp.bfloat16)

    w2p = jnp.pad(w2f, ((0, 0), (0, cout_pad - cout), (0, cout_pad - cout))).reshape(k2, cout_pad)
    w2p = jnp.pad(w2p, ((0, k2_pad - k2), (0, 0))).astype(jnp.bfloat16)

    wdp = jnp.pad(wdf, ((0, cin_pad - cin), (0, cout_pad - cout))).astype(jnp.bfloat16)

    arrays = dict(
        w1=w1p,
        b1=jnp.pad(b1, ((0, 0), (0, cout_pad - cout))),
        w2=w2p,
        wd=wdp,
        b2d=jnp.pad(b2 + bd, ((0, 0), (0, cout_pad - cout))),
    )
    cfg = dict(cin=cin, cout=cout, ks=ks, K=K, cin_pad=cin_pad, cout_pad=cout_pad,
               k1_pad=k1_pad, tk1=tk1, k2_pad=k2_pad, tk2=tk2,
               tn=tn, vmem_limit_bytes=vmem_limit_bytes)
    return arrays, cfg


# --------------------------------------------------------------------------------------
# ResidualBlock forward
# --------------------------------------------------------------------------------------
def residual_block_forward(feats, coords, arrays, *, cfg, dilation=1):
    n, cin = feats.shape
    cout, cout_pad, cin_pad = cfg["cout"], cfg["cout_pad"], cfg["cin_pad"]

    tn = min(cfg["tn"], _round_up(n, 16))          # multiple of 16 -> bf16-safe block rows
    n_pad = _round_up(n, tn)

    # kernel map built once and shared by both 3x3x3 convs (same coords, stride 1)
    nbr_idx = build_kernel_map(coords, ks=cfg["ks"], dilation=dilation)      # [K, N]
    nbr_t = jnp.transpose(nbr_idx)                                           # [N, K]
    nbr_t = jnp.pad(nbr_t, ((0, n_pad - n), (0, 0)), constant_values=n)      # pad rows -> zero row

    feats_bf = feats.astype(jnp.bfloat16)          # cast BEFORE the 27x gather

    # --- stage 1: conv1 + BN1 + ReLU -------------------------------------------------
    nbr1 = _extend_offsets(nbr_t, cin, cfg["k1_pad"], sentinel=n)
    a1 = gather_slab(feats_bf, nbr1, cfg["k1_pad"])                          # [n_pad, k1_pad] bf16
    h1 = conv_matmul(a1, arrays["w1"], arrays["b1"], out_dtype=jnp.bfloat16,
                     tn=tn, tk=cfg["tk1"], vmem_limit_bytes=cfg["vmem_limit_bytes"])
    # h1: [n_pad, cout_pad] bf16. Padded rows (>= n) hold relu(b1) but are never referenced
    # below because the kernel map only indexes [0, n) or the zero-row sentinel.

    # --- stage 2: conv2 + BN2 + downsample(1x1 conv + BN) + residual add + ReLU ------
    nbr2 = jnp.where(nbr_t == n, n_pad, nbr_t)     # sentinel -> zero row appended after h1
    nbr2 = _extend_offsets(nbr2, cout_pad, cfg["k2_pad"], sentinel=n_pad)
    a2 = gather_slab(h1, nbr2, cfg["k2_pad"])                                # [n_pad, k2_pad] bf16

    x_res = jnp.pad(feats_bf, ((0, n_pad - n), (0, cin_pad - cin)))          # [n_pad, cin_pad] bf16
    out = conv_matmul(a2, arrays["w2"], arrays["b2d"], out_dtype=jnp.float32,
                      tn=tn, tk=cfg["tk2"], vmem_limit_bytes=cfg["vmem_limit_bytes"],
                      residual=(x_res, arrays["wd"]))                        # [n_pad, cout_pad] f32
    return out[:n, :cout]


# --------------------------------------------------------------------------------------
# Pure-JAX f32 reference (for correctness check)
# --------------------------------------------------------------------------------------
def _im2col_ref(f, nbr_idx):
    n, c = f.shape
    fz = jnp.concatenate([f, jnp.zeros((1, c), f.dtype)], axis=0)
    return fz[nbr_idx.T].reshape(n, -1)            # [N, K*C]


def _reference_forward(feats, coords, params, *, ks=3, dilation=1):
    K = ks ** 3
    n, cin = feats.shape
    cout = params["w1"].shape[-1]
    nbr_idx = build_kernel_map(coords, ks=ks, dilation=dilation)
    s1, b1 = fold_bn(*params["bn1"])
    s2, b2 = fold_bn(*params["bn2"])
    sd, bd = fold_bn(*params["bnd"])
    a1 = _im2col_ref(feats, nbr_idx)
    h1 = jnp.maximum(a1 @ params["w1"].reshape(K * cin, cout) * s1 + b1, 0.0)
    a2 = _im2col_ref(h1, nbr_idx)
    main = a2 @ params["w2"].reshape(K * cout, cout) * s2 + b2
    ds = feats @ params["wd"] * sd + bd
    return jnp.maximum(main + ds, 0.0)


# --------------------------------------------------------------------------------------
# Deterministic parameter init + demo
# --------------------------------------------------------------------------------------
def init_params(key, inc, outc, ks=3):
    k = ks ** 3
    keys = jax.random.split(key, 8)

    def bn_params(kk, c):
        k1, k2, k3 = jax.random.split(kk, 3)
        gamma = 1.0 + 0.1 * jax.random.normal(k1, (c,), jnp.float32)
        beta = 0.1 * jax.random.normal(k2, (c,), jnp.float32)
        rmean = 0.1 * jax.random.normal(k3, (c,), jnp.float32)
        rvar = jnp.ones((c,), jnp.float32)
        return (gamma, beta, rmean, rvar)

    return {
        # torchsparse Conv3d weights in [K, Cin, Cout] layout
        "w1": 0.1 * jax.random.normal(keys[0], (k, inc, outc), jnp.float32),
        "w2": 0.1 * jax.random.normal(keys[1], (k, outc, outc), jnp.float32),
        "wd": 0.1 * jax.random.normal(keys[2], (inc, outc), jnp.float32),
        "bn1": bn_params(keys[3], outc),
        "bn2": bn_params(keys[4], outc),
        "bnd": bn_params(keys[5], outc),
    }


if __name__ == "__main__":
    key = jax.random.PRNGKey(0)
    k_coord, k_feat, k_param = jax.random.split(key, 3)

    INC, OUTC, KS = 4, 8, 3        # inc != outc -> downsample = 1x1 conv + BN (as in the module)
    N, GRID = 64, 8                # 64 active voxels in an 8x8x8 grid

    # unique voxel coordinates (deterministic)
    flat = jax.random.permutation(k_coord, GRID ** 3)[:N]
    coords = jnp.stack(
        [flat // (GRID * GRID), (flat // GRID) % GRID, flat % GRID], axis=-1
    ).astype(jnp.int32)                                          # [N, 3]

    feats = jax.random.normal(k_feat, (N, INC), jnp.float32)     # [N, Cin]
    params = init_params(k_param, INC, OUTC, KS)

    # one-time BN fold / pad / bf16 cast, outside the jitted forward
    arrays, cfg = prepare_residual_block(params, cin=INC, cout=OUTC, ks=KS)

    fwd = jax.jit(functools.partial(residual_block_forward, cfg=cfg))
    out = jax.block_until_ready(fwd(feats, coords, arrays))
    ref = jax.block_until_ready(_reference_forward(feats, coords, params, ks=KS, dilation=1))

    assert out.shape == (N, OUTC)
    assert bool(jnp.all(out >= 0.0))                 # final ReLU
    assert bool(jnp.all(jnp.isfinite(out)))
    assert float(jnp.max(jnp.abs(out - ref))) < 0.1  # bf16 MXU inputs, f32 accumulate
    print("KERNEL_OK")
</pallas_src>

<mosaic_0001>
module attributes {stable_mosaic.version = 11 : i64} {
  func.func @_mm_bias_relu_kernel(%arg0: i32, %arg1: i32, %arg2: memref<64x128xbf16, #tpu.memory_space<vmem>>, %arg3: memref<128x8xbf16, #tpu.memory_space<vmem>>, %arg4: memref<1x8xf32, #tpu.memory_space<vmem>>, %arg5: memref<64x8xbf16, #tpu.memory_space<vmem>>, %arg6: memref<64x8xf32, #tpu.memory_space<vmem>>) attributes {dimension_semantics = [#tpu.dimension_semantics<parallel>, #tpu.dimension_semantics<arbitrary>], iteration_bounds = array<i64: 1, 1>, scalar_prefetch = 0 : i64, scratch_operands = 1 : i64, tpu.core_type = #tpu.core_type<tc>, window_params = [{transform_indices = @transform_0, window_bounds = array<i64: 64, 128>}, {transform_indices = @transform_1, window_bounds = array<i64: 128, 8>}, {pipeline_mode = #tpu.pipeline_mode<synchronous>, transform_indices = @transform_2, window_bounds = array<i64: 1, 8>}, {transform_indices = @transform_3, window_bounds = array<i64: 64, 8>}]} {
    %c0_i32 = arith.constant 0 : i32
    %0 = arith.cmpi eq, %arg1, %c0_i32 : i32
    %1 = arith.extui %0 : i1 to i32
    %c0_i32_0 = arith.constant 0 : i32
    %2 = arith.cmpi ne, %1, %c0_i32_0 : i32
    scf.if %2 {
      %cst_10 = arith.constant 0.000000e+00 : f32
      %12 = vector.broadcast %cst_10 : f32 to vector<64x8xf32>
      %c0_11 = arith.constant 0 : index
      %c0_12 = arith.constant 0 : index
      %13 = vector.load %arg6[%c0_11, %c0_12] : memref<64x8xf32, #tpu.memory_space<vmem>>, vector<64x8xf32>
      tpu.vector_store %arg6[%c0_11, %c0_12], %12 {strides = array<i32>} : memref<64x8xf32, #tpu.memory_space<vmem>>, vector<64x8xf32>,
    } else {
    }
    %c0 = arith.constant 0 : index
    %c0_1 = arith.constant 0 : index
    %3 = vector.load %arg6[%c0, %c0_1] : memref<64x8xf32, #tpu.memory_space<vmem>>, vector<64x8xf32>
    %c0_2 = arith.constant 0 : index
    %c0_3 = arith.constant 0 : index
    %4 = vector.load %arg2[%c0_2, %c0_3] : memref<64x128xbf16, #tpu.memory_space<vmem>>, vector<64x128xbf16>
    %c0_4 = arith.constant 0 : index
    %c0_5 = arith.constant 0 : index
    %5 = vector.load %arg3[%c0_4, %c0_5] : memref<128x8xbf16, #tpu.memory_space<vmem>>, vector<128x8xbf16>
    %cst = arith.constant dense<0.000000e+00> : vector<64x8xf32>
    %6 = tpu.matmul %4, %5, %cst {dimension_numbers = #tpu.dot_dimension_numbers<[1], [0], [0], [1], [0, 0, 1, 1], [], []>} : vector<64x128xbf16>, vector<128x8xbf16>, vector<64x8xf32> -> vector<64x8xf32>
    %7 = arith.addf %3, %6 : vector<64x8xf32>
    %c0_6 = arith.constant 0 : index
    %c0_7 = arith.constant 0 : index
    %8 = vector.load %arg6[%c0_6, %c0_7] : memref<64x8xf32, #tpu.memory_space<vmem>>, vector<64x8xf32>
    tpu.vector_store %arg6[%c0_6, %c0_7], %7 {strides = array<i32>} : memref<64x8xf32, #tpu.memory_space<vmem>>, vector<64x8xf32>,
    %c0_i32_8 = arith.constant 0 : i32
    %9 = arith.cmpi eq, %arg1, %c0_i32_8 : i32
    %10 = arith.extui %9 : i1 to i32
    %c0_i32_9 = arith.constant 0 : i32
    %11 = arith.cmpi ne, %10, %c0_i32_9 : i32
    scf.if %11 {
      %c0_10 = arith.constant 0 : index
      %c0_11 = arith.constant 0 : index
      %12 = vector.load %arg6[%c0_10, %c0_11] : memref<64x8xf32, #tpu.memory_space<vmem>>, vector<64x8xf32>
      %c0_12 = arith.constant 0 : index
      %c0_13 = arith.constant 0 : index
      %13 = vector.load %arg4[%c0_12, %c0_13] : memref<1x8xf32, #tpu.memory_space<vmem>>, vector<1x8xf32>
      %14 = vector.broadcast %13 : vector<1x8xf32> to vector<64x8xf32>
      %15 = arith.addf %12, %14 : vector<64x8xf32>
      %cst_14 = arith.constant 0.000000e+00 : f32
      %16 = vector.broadcast %cst_14 : f32 to vector<64x8xf32>
      %17 = arith.maximumf %15, %16 : vector<64x8xf32>
      %18 = arith.truncf %17 : vector<64x8xf32> to vector<64x8xbf16>
      %c0_15 = arith.constant 0 : index
      %c0_16 = arith.constant 0 : index
      %19 = vector.load %arg5[%c0_15, %c0_16] : memref<64x8xbf16, #tpu.memory_space<vmem>>, vector<64x8xbf16>
      tpu.vector_store %arg5[%c0_15, %c0_16], %18 {strides = array<i32>} : memref<64x8xbf16, #tpu.memory_space<vmem>>, vector<64x8xbf16>,
    } else {
    }
    return
  }
  func.func @transform_0(%arg0: i32, %arg1: i32) -> (i32, i32) {
    %c0_i32 = arith.constant 0 : i32
    return %arg0, %arg1 : i32, i32
  }
  func.func @transform_1(%arg0: i32, %arg1: i32) -> (i32, i32) {
    %c0_i32 = arith.constant 0 : i32
    %c0_i32_0 = arith.constant 0 : i32
    return %arg1, %c0_i32 : i32, i32
  }
  func.func @transform_2(%arg0: i32, %arg1: i32) -> (i32, i32) {
    %c0_i32 = arith.constant 0 : i32
    %c0_i32_0 = arith.constant 0 : i32
    %c0_i32_1 = arith.constant 0 : i32
    return %c0_i32, %c0_i32_0 : i32, i32
  }
  func.func @transform_3(%arg0: i32, %arg1: i32) -> (i32, i32) {
    %c0_i32 = arith.constant 0 : i32
    %c0_i32_0 = arith.constant 0 : i32
    return %arg0, %c0_i32 : i32, i32
  }
}

module attributes {stable_mosaic.version = 11 : i64} {
  func.func @_mm_residual_bias_relu_kernel(%arg0: i32, %arg1: i32, %arg2: memref<64x256xbf16, #tpu.memory_space<vmem>>, %arg3: memref<256x8xbf16, #tpu.memory_space<vmem>>, %arg4: memref<64x128xbf16, #tpu.memory_space<vmem>>, %arg5: memref<128x8xbf16, #tpu.memory_space<vmem>>, %arg6: memref<1x8xf32, #tpu.memory_space<vmem>>, %arg7: memref<64x8xf32, #tpu.memory_space<vmem>>, %arg8: memref<64x8xf32, #tpu.memory_space<vmem>>) attributes {dimension_semantics = [#tpu.dimension_semantics<parallel>, #tpu.dimension_semantics<arbitrary>], iteration_bounds = array<i64: 1, 1>, scalar_prefetch = 0 : i64, scratch_operands = 1 : i64, tpu.core_type = #tpu.core_type<tc>, window_params = [{transform_indices = @transform_0, window_bounds = array<i64: 64, 256>}, {transform_indices = @transform_1, window_bounds = array<i64: 256, 8>}, {transform_indices = @transform_2, window_bounds = array<i64: 64, 128>}, {pipeline_mode = #tpu.pipeline_mode<synchronous>, transform_indices = @transform_3, window_bounds = array<i64: 128, 8>}, {pipeline_mode = #tpu.pipeline_mode<synchronous>, transform_indices = @transform_4, window_bounds = array<i64: 1, 8>}, {transform_indices = @transform_5, window_bounds = array<i64: 64, 8>}]} {
    %c0_i32 = arith.constant 0 : i32
    %0 = arith.cmpi eq, %arg1, %c0_i32 : i32
    %1 = arith.extui %0 : i1 to i32
    %c0_i32_0 = arith.constant 0 : i32
    %2 = arith.cmpi ne, %1, %c0_i32_0 : i32
    scf.if %2 {
      %c0_10 = arith.constant 0 : index
      %c0_11 = arith.constant 0 : index
      %12 = vector.load %arg4[%c0_10, %c0_11] : memref<64x128xbf16, #tpu.memory_space<vmem>>, vector<64x128xbf16>
      %c0_12 = arith.constant 0 : index
      %c0_13 = arith.constant 0 : index
      %13 = vector.load %arg5[%c0_12, %c0_13] : memref<128x8xbf16, #tpu.memory_space<vmem>>, vector<128x8xbf16>
      %cst_14 = arith.constant dense<0.000000e+00> : vector<64x8xf32>
      %14 = tpu.matmul %12, %13, %cst_14 {dimension_numbers = #tpu.dot_dimension_numbers<[1], [0], [0], [1], [0, 0, 1, 1], [], []>} : vector<64x128xbf16>, vector<128x8xbf16>, vector<64x8xf32> -> vector<64x8xf32>
      %c0_15 = arith.constant 0 : index
      %c0_16 = arith.constant 0 : index
      %15 = vector.load %arg8[%c0_15, %c0_16] : memref<64x8xf32, #tpu.memory_space<vmem>>, vector<64x8xf32>
      tpu.vector_store %arg8[%c0_15, %c0_16], %14 {strides = array<i32>} : memref<64x8xf32, #tpu.memory_space<vmem>>, vector<64x8xf32>,
    } else {
    }
    %c0 = arith.constant 0 : index
    %c0_1 = arith.constant 0 : index
    %3 = vector.load %arg8[%c0, %c0_1] : memref<64x8xf32, #tpu.memory_space<vmem>>, vector<64x8xf32>
    %c0_2 = arith.constant 0 : index
    %c0_3 = arith.constant 0 : index
    %4 = vector.load %arg2[%c0_2, %c0_3] : memref<64x256xbf16, #tpu.memory_space<vmem>>, vector<64x256xbf16>
    %c0_4 = arith.constant 0 : index
    %c0_5 = arith.constant 0 : index
    %5 = vector.load %arg3[%c0_4, %c0_5] : memref<256x8xbf16, #tpu.memory_space<vmem>>, vector<256x8xbf16>
    %cst = arith.constant dense<0.000000e+00> : vector<64x8xf32>
    %6 = tpu.matmul %4, %5, %cst {dimension_numbers = #tpu.dot_dimension_numbers<[1], [0], [0], [1], [0, 0, 1, 1], [], []>} : vector<64x256xbf16>, vector<256x8xbf16>, vector<64x8xf32> -> vector<64x8xf32>
    %7 = arith.addf %3, %6 : vector<64x8xf32>
    %c0_6 = arith.constant 0 : index
    %c0_7 = arith.constant 0 : index
    %8 = vector.load %arg8[%c0_6, %c0_7] : memref<64x8xf32, #tpu.memory_space<vmem>>, vector<64x8xf32>
    tpu.vector_store %arg8[%c0_6, %c0_7], %7 {strides = array<i32>} : memref<64x8xf32, #tpu.memory_space<vmem>>, vector<64x8xf32>,
    %c0_i32_8 = arith.constant 0 : i32
    %9 = arith.cmpi eq, %arg1, %c0_i32_8 : i32
    %10 = arith.extui %9 : i1 to i32
    %c0_i32_9 = arith.constant 0 : i32
    %11 = arith.cmpi ne, %10, %c0_i32_9 : i32
    scf.if %11 {
      %c0_10 = arith.constant 0 : index
      %c0_11 = arith.constant 0 : index
      %12 = vector.load %arg8[%c0_10, %c0_11] : memref<64x8xf32, #tpu.memory_space<vmem>>, vector<64x8xf32>
      %c0_12 = arith.constant 0 : index
      %c0_13 = arith.constant 0 : index
      %13 = vector.load %arg6[%c0_12, %c0_13] : memref<1x8xf32, #tpu.memory_space<vmem>>, vector<1x8xf32>
      %14 = vector.broadcast %13 : vector<1x8xf32> to vector<64x8xf32>
      %15 = arith.addf %12, %14 : vector<64x8xf32>
      %cst_14 = arith.constant 0.000000e+00 : f32
      %16 = vector.broadcast %cst_14 : f32 to vector<64x8xf32>
      %17 = arith.maximumf %15, %16 : vector<64x8xf32>
      %c0_15 = arith.constant 0 : index
      %c0_16 = arith.constant 0 : index
      %18 = vector.load %arg7[%c0_15, %c0_16] : memref<64x8xf32, #tpu.memory_space<vmem>>, vector<64x8xf32>
      tpu.vector_store %arg7[%c0_15, %c0_16], %17 {strides = array<i32>} : memref<64x8xf32, #tpu.memory_space<vmem>>, vector<64x8xf32>,
    } else {
    }
    return
  }
  func.func @transform_0(%arg0: i32, %arg1: i32) -> (i32, i32) {
    %c0_i32 = arith.constant 0 : i32
    return %arg0, %arg1 : i32, i32
  }
  func.func @transform_1(%arg0: i32, %arg1: i32) -> (i32, i32) {
    %c0_i32 = arith.constant 0 : i32
    %c0_i32_0 = arith.constant 0 : i32
    return %arg1, %c0_i32 : i32, i32
  }
  func.func @transform_2(%arg0: i32, %arg1: i32) -> (i32, i32) {
    %c0_i32 = arith.constant 0 : i32
    %c0_i32_0 = arith.constant 0 : i32
    return %arg0, %c0_i32 : i32, i32
  }
  func.func @transform_3(%arg0: i32, %arg1: i32) -> (i32, i32) {
    %c0_i32 = arith.constant 0 : i32
    %c0_i32_0 = arith.constant 0 : i32
    %c0_i32_1 = arith.constant 0 : i32
    return %c0_i32, %c0_i32_0 : i32, i32
  }
  func.func @transform_4(%arg0: i32, %arg1: i32) -> (i32, i32) {
    %c0_i32 = arith.constant 0 : i32
    %c0_i32_0 = arith.constant 0 : i32
    %c0_i32_1 = arith.constant 0 : i32
    return %c0_i32, %c0_i32_0 : i32, i32
  }
  func.func @transform_5(%arg0: i32, %arg1: i32) -> (i32, i32) {
    %c0_i32 = arith.constant 0 : i32
    %c0_i32_0 = arith.constant 0 : i32
    return %arg0, %c0_i32 : i32, i32
  }
}

</mosaic_0001>

<llo_original>
// kernel: custom-call
$region0: #{custom-call}
  %s0 = inlined_call_operand.vmem [shape: u32[27,64], index: 0, kind: output, shape index: {}]

// kernel: squeeze.6
$region0: #{squeeze.6}
  %s0 = inlined_call_operand.vmem [shape: s32[1728], index: 0, kind: input, shape index: {}]
  %s1 = inlined_call_operand.vmem [shape: s32[27,64], index: 1, kind: output, shape index: {}]
  %v2 = vld [vmem:[%s0] sm:$0xff]
  %vm3 = vcmask 523264
  %4 = vst.msk [vmem:[%s1] ss:$2 sm:$0xff] %vm3, %v2
  %s5 = scalar_lea.vmem %s0, 8
  %v6 = vld [vmem:[%s5] sm:$0x3f]
  %vm7 = vcmask 523264
  %s8 = scalar_lea.vmem %s1, 16
  %9 = vst.msk [vmem:[%s8] ss:$2 sm:$0x3f] %vm7, %v6
  %v10 = vld [vmem:[%s0] sm:$0xff]
  %11 = vrot.lane.b32.xlu0 %v10, 64
  %v12 = vpop.permute.xlu0 %11
  %vm13 = vcmask 523264
  %s14 = scalar_lea.vmem %s1, 1
  %15 = vst.msk [vmem:[%s14] ss:$2 sm:$0xff] %vm13, %v12
  %s16 = scalar_lea.vmem %s0, 8
  %v17 = vld [vmem:[%s16] sm:$0x1f]
  %18 = vrot.lane.b32.xlu0 %v17, 64
  %v19 = vpop.permute.xlu0 %18
  %vm20 = vcmask 523264
  %s21 = scalar_lea.vmem %s1, 17
  %22 = vst.msk [vmem:[%s21] ss:$2 sm:$0x1f] %vm20, %v19

// kernel: residual_block_forward.2
$region0: #{residual_block_forward.2}
  #allocation0 [shape = 'u32[]', space=smem, size = 0x4, offset = 0x4, fixed_abs, tag = 'smem constant byte address 0x4 - core index']
  #allocation1 [shape = 'u32[144,128]{1,0:T(1,128)}', space=vmem, size = 0x12000, scoped, tag = 'internal scratch']
  #allocation2 [shape = 'f32[64,8]{1,0:T(8,128)}', space=vmem, size = 0x8000, scoped, tag = 'scratch operand']
  %s0 = inlined_call_operand.hbm [shape: bf16[64,128], index: 0, kind: input, shape index: {}]
  %s1 = inlined_call_operand.hbm [shape: bf16[128,8], index: 1, kind: input, shape index: {}]
  %s2 = inlined_call_operand.hbm [shape: f32[1,8], index: 2, kind: input, shape index: {}]
  %s3 = inlined_call_operand.hbm [shape: bf16[64,8], index: 3, kind: output, shape index: {}]
  %s4 = sld [smem:[#allocation0]]
  $region42: #{residual_block_forward.2} parent=0
    _
  %s6 = ssub.s32 1, %s4
  %s7 = scalar_select 0, %s6, %s4
  $region1: #{residual_block_forward.2} parent=0
    #allocation3 [shape = 'u8[16384]{0}', space=vmem, size = 0x4000, scoped, tag = 'input window, operand 0, single buffered']
    #allocation4 [shape = 's32[1]{0}', space=sflag, size = 0x4, scoped, tag = 'scoped memory for residual_block_forward.2']
    #allocation5 [shape = 's32[1]{0}', space=sflag, size = 0x4, scoped, tag = 'scoped memory for residual_block_forward.2']
    #allocation6 [shape = 'u8[32768]{0}', space=vmem, size = 0x8000, scoped, tag = 'input window, operand 1, single buffered']
    #allocation7 [shape = 's32[1]{0}', space=sflag, size = 0x4, scoped, tag = 'scoped memory for residual_block_forward.2']
    #allocation8 [shape = 'u8[512]{0}', space=vmem, size = 0x400, scoped, tag = 'input window, operand 2, single buffered']
    #allocation9 [shape = 'u8[16384]{0}', space=vmem, size = 0x4000, scoped, tag = 'output window, operand 0, single buffered']
    %8 = vsyncpa [#allocation4], 0
    %9 = vsyncpa [#allocation7], 0
    %10 = vsyncpa [#allocation5], 0
    // Predicated region
    $region2: #{residual_block_forward.2} parent=1 // pred_check
      _
    $region3: #{residual_block_forward.2} parent=1 // pred_check_branch
      %12 = sbr.rel (0) target = $region5
    $region4: #{residual_block_forward.2} parent=1 // pred_region
      %s14 = ssub.s32 512, 512
      %15 = vsyncadd [#allocation4], %s14
      %s16 = sshll.u32 [#allocation3], 4
      %s17 = int_to_ptr.vmem [resolvable:$true] %s16
      %22 = dma.hbm_to_vmem [thread:$0]  %s0, 512, %s17, [#allocation4], 64, 64, 4
    $region5: #{residual_block_forward.2} parent=1 // pred_fallthru
      _
    // Predicated region
    $region6: #{residual_block_forward.2} parent=1 // pred_check
      _
    $region7: #{residual_block_forward.2} parent=1 // pred_check_branch
      %24 = sbr.rel (0) target = $region9
    $region8: #{residual_block_forward.2} parent=1 // pred_region
      %s26 = ssub.s32 1024, 1024
      %27 = vsyncadd [#allocation7], %s26
      %s28 = sshll.u32 [#allocation6], 4
      %s29 = int_to_ptr.vmem [resolvable:$true] %s28
      %34 = dma.hbm_to_vmem [thread:$0]  %s1, 1024, %s29, [#allocation7], 64, 64, 4
    $region9: #{residual_block_forward.2} parent=1 // pred_fallthru
      _
    // Predicated region
    $region10: #{residual_block_forward.2} parent=1 // pred_check
      _
    $region11: #{residual_block_forward.2} parent=1 // pred_check_branch
      %36 = sbr.rel (0) target = $region13
    $region12: #{residual_block_forward.2} parent=1 // pred_region
      %s38 = ssub.s32 16, 16
      %39 = vsyncadd [#allocation7], %s38
      %s41 = sshll.u32 [#allocation8], 4
      %s42 = int_to_ptr.vmem [resolvable:$true] %s41
      %44 = dma.hbm_to_vmem [thread:$0]  %s2, 16, %s42, [#allocation7]
    $region13: #{residual_block_forward.2} parent=1 // pred_fallthru
      _
    // Predicated region
    $region14: #{residual_block_forward.2} parent=1 // pred_check
      _
    $region15: #{residual_block_forward.2} parent=1 // pred_check_branch
      %46 = sbr.rel (0) target = $region17
    $region16: #{residual_block_forward.2} parent=1 // pred_region
      %47 = dma.done [#allocation4], 512
    $region17: #{residual_block_forward.2} parent=1 // pred_fallthru
      _
    // Predicated region
    $region18: #{residual_block_forward.2} parent=1 // pred_check
      _
    $region19: #{residual_block_forward.2} parent=1 // pred_check_branch
      %49 = sbr.rel (0) target = $region21
    $region20: #{residual_block_forward.2} parent=1 // pred_region
      %50 = dma.done [#allocation7], 1024
    $region21: #{residual_block_forward.2} parent=1 // pred_fallthru
      _
    // Predicated region
    $region22: #{residual_block_forward.2} parent=1 // pred_check
      _
    $region23: #{residual_block_forward.2} parent=1 // pred_check_branch
      %52 = sbr.rel (0) target = $region25
    $region24: #{residual_block_forward.2} parent=1 // pred_region
      %53 = dma.done [#allocation7], 16
    $region25: #{residual_block_forward.2} parent=1 // pred_fallthru
      _
    %p55 = scmp.eq.s32.totalorder 0, 0
    // Predicated region
    $region26: #{residual_block_forward.2} parent=1 // pred_check
      %p56 = pneg %p55
    $region27: #{residual_block_forward.2} parent=1 // pred_check_branch
      %58 = sbr.rel (%p56) target = $region29
    $region28: #{residual_block_forward.2} parent=1 // pred_region
      %vm59 = vcmask 64512
      %60 = vst.msk [vmem:[#allocation2] sm:$0xff] %vm59, 0.0
      %61 = vst.msk [vmem:[#allocation2 + $0x8] sm:$0xff] %vm59, 0.0
      %62 = vst.msk [vmem:[#allocation2 + $0x10] sm:$0xff] %vm59, 0.0
      %63 = vst.msk [vmem:[#allocation2 + $0x18] sm:$0xff] %vm59, 0.0
      %64 = vst.msk [vmem:[#allocation2 + $0x20] sm:$0xff] %vm59, 0.0
      %65 = vst.msk [vmem:[#allocation2 + $0x28] sm:$0xff] %vm59, 0.0
      %66 = vst.msk [vmem:[#allocation2 + $0x30] sm:$0xff] %vm59, 0.0
      %67 = vst.msk [vmem:[#allocation2 + $0x38] sm:$0xff] %vm59, 0.0
    $region29: #{residual_block_forward.2} parent=1 // pred_fallthru
      _
    %v68 = vld [vmem:[#allocation2] sm:$0xff]
    %v69 = vld [vmem:[#allocation2 + $0x8] sm:$0xff]
    %v70 = vld [vmem:[#allocation2 + $0x10] sm:$0xff]
    %v71 = vld [vmem:[#allocation2 + $0x18] sm:$0xff]
    %v72 = vld [vmem:[#allocation2 + $0x20] sm:$0xff]
    %v73 = vld [vmem:[#allocation2 + $0x28] sm:$0xff]
    %v74 = vld [vmem:[#allocation2 + $0x30] sm:$0xff]
    %v75 = vld [vmem:[#allocation2 + $0x38] sm:$0xff]
    %v76 = vld [vmem:[#allocation3] sm:$0xf]
    %v77 = vld [vmem:[#allocation3 + $0x4] sm:$0xf]
    %v78 = vld [vmem:[#allocation3 + $0x8] sm:$0xf]
    %v79 = vld [vmem:[#allocation3 + $0xc] sm:$0xf]
    %v80 = vld [vmem:[#allocation3 + $0x10] sm:$0xf]
    %v81 = vld [vmem:[#allocation3 + $0x14] sm:$0xf]
    %v82 = vld [vmem:[#allocation3 + $0x18] sm:$0xf]
    %v83 = vld [vmem:[#allocation3 + $0x1c] sm:$0xf]
    %v84 = vld [vmem:[#allocation6] sm:$0xf]
    %v85 = vld [vmem:[#allocation6 + $0x4] sm:$0xf]
    %v86 = vld [vmem:[#allocation6 + $0x8] sm:$0xf]
    %v87 = vld [vmem:[#allocation6 + $0xc] sm:$0xf]
    %v88 = vld [vmem:[#allocation6 + $0x10] sm:$0xf]
    %v89 = vld [vmem:[#allocation6 + $0x14] sm:$0xf]
    %v90 = vld [vmem:[#allocation6 + $0x18] sm:$0xf]
    %v91 = vld [vmem:[#allocation6 + $0x1c] sm:$0xf]
    %v92 = vld [vmem:[#allocation6 + $0x20] sm:$0xf]
    %v93 = vld [vmem:[#allocation6 + $0x24] sm:$0xf]
    %v94 = vld [vmem:[#allocation6 + $0x28] sm:$0xf]
    %v95 = vld [vmem:[#allocation6 + $0x2c] sm:$0xf]
    %v96 = vld [vmem:[#allocation6 + $0x30] sm:$0xf]
    %v97 = vld [vmem:[#allocation6 + $0x34] sm:$0xf]
    %v98 = vld [vmem:[#allocation6 + $0x38] sm:$0xf]
    %v99 = vld [vmem:[#allocation6 + $0x3c] sm:$0xf]
    %v108 = vunpack.c.l.b16 %v76
    %v109 = vunpack.c.l.b16 %v77
    %v110 = vunpack.c.l.b16 %v78
    %v111 = vunpack.c.l.b16 %v79
    %v112 = vunpack.c.l.b16 %v80
    %v113 = vunpack.c.l.b16 %v81
    %v114 = vunpack.c.l.b16 %v82
    %v115 = vunpack.c.l.b16 %v83
    %v116 = vpack.c.b16 %v109, %v108
    %v117 = vpack.c.b16 %v111, %v110
    %v118 = vpack.c.b16 %v113, %v112
    %v119 = vpack.c.b16 %v115, %v114
    %v140 = vunpack.c.l.b16 %v84
    %v141 = vunpack.c.l.b16 %v85
    %v142 = vunpack.c.l.b16 %v86
    %v143 = vunpack.c.l.b16 %v87
    %v144 = vunpack.c.l.b16 %v88
    %v145 = vunpack.c.l.b16 %v89
    %v146 = vunpack.c.l.b16 %v90
    %v147 = vunpack.c.l.b16 %v91
    %v148 = vunpack.c.l.b16 %v92
    %v149 = vunpack.c.l.b16 %v93
    %v150 = vunpack.c.l.b16 %v94
    %v151 = vunpack.c.l.b16 %v95
    %v152 = vunpack.c.l.b16 %v96
    %v153 = vunpack.c.l.b16 %v97
    %v154 = vunpack.c.l.b16 %v98
    %v155 = vunpack.c.l.b16 %v99
    %v156 = vpack.c.b16 %v141, %v140
    %v157 = vpack.c.b16 %v143, %v142
    %v158 = vpack.c.b16 %v145, %v144
    %v159 = vpack.c.b16 %v147, %v146
    %v160 = vpack.c.b16 %v149, %v148
    %v161 = vpack.c.b16 %v151, %v150
    %v162 = vpack.c.b16 %v153, %v152
    %v163 = vpack.c.b16 %v155, %v154
    %172 = vmatprep.subr.bf16.mxu0 0
    %173 = vmatpush1.bf16.msra.mxu0 %v156
    %174 = vmatprep.subr.bf16.mxu0 0
    %175 = vmatpush1.bf16.msra.mxu0 %v157
    %176 = vmatprep.subr.bf16.mxu0 0
    %177 = vmatpush1.bf16.msra.mxu0 %v158
    %178 = vmatprep.subr.bf16.mxu0 0
    %179 = vmatpush1.bf16.msra.mxu0 %v159
    %180 = vmatprep.subr.bf16.mxu0 0
    %181 = vmatpush1.bf16.msra.mxu0 %v160
    %182 = vmatprep.subr.bf16.mxu0 0
    %183 = vmatpush1.bf16.msra.mxu0 %v161
    %184 = vmatprep.subr.bf16.mxu0 0
    %185 = vmatpush1.bf16.msra.mxu0 %v162
    %186 = vmatprep.subr.bf16.mxu0 0
    %187 = vmatpush1.bf16.msra.mxu0 %v163
    %188 = vmatprep.subr.bf16.mxu0 0
    %189 = vmatpush1.bf16.msra.mxu0 0
    %190 = vmatprep.subr.bf16.mxu0 0
    %191 = vmatpush1.bf16.msra.mxu0 0
    %192 = vmatprep.subr.bf16.mxu0 0
    %193 = vmatpush1.bf16.msra.mxu0 0
    %194 = vmatprep.subr.bf16.mxu0 0
    %195 = vmatpush1.bf16.msra.mxu0 0
    %196 = vmatprep.subr.bf16.mxu0 0
    %197 = vmatpush1.bf16.msra.mxu0 0
    %198 = vmatprep.subr.bf16.mxu0 0
    %199 = vmatpush1.bf16.msra.mxu0 0
    %200 = vmatprep.subr.bf16.mxu0 0
    %201 = vmatpush1.bf16.msra.mxu0 0
    %202 = vmatprep.subr.bf16.mxu0 0
    %203 = vmatpush1.bf16.msra.mxu0 0
    %204 = vmatprep.mubr.bf16.mxu0 0
    %205 = vmatmul.mubr.bf16.gmra.mrb[0].mxu0 %v116
    %v206 = vpop.f32.mrb[0].mxu0
    %v207 = vadd.f32 0.0, %v206
    %v208 = vpop.f32.mrb[0].mxu0
    %v209 = vpop.f32.mrb[0].mxu0
    %v210 = vadd.f32 0.0, %v209
    %v211 = vpop.f32.mrb[0].mxu0
    %212 = vmatprep.mubr.bf16.mxu0 0
    %213 = vmatmul.mubr.bf16.gmra.mrb[0].mxu0 %v117
    %v214 = vpop.f32.mrb[0].mxu0
    %v215 = vadd.f32 0.0, %v214
    %v216 = vpop.f32.mrb[0].mxu0
    %v217 = vpop.f32.mrb[0].mxu0
    %v218 = vadd.f32 0.0, %v217
    %v219 = vpop.f32.mrb[0].mxu0
    %220 = vmatprep.mubr.bf16.mxu0 0
    %221 = vmatmul.mubr.bf16.gmra.mrb[0].mxu0 %v118
    %v222 = vpop.f32.mrb[0].mxu0
    %v223 = vadd.f32 0.0, %v222
    %v224 = vpop.f32.mrb[0].mxu0
    %v225 = vpop.f32.mrb[0].mxu0
    %v226 = vadd.f32 0.0, %v225
    %v227 = vpop.f32.mrb[0].mxu0
    %228 = vmatprep.mubr.bf16.mxu0 0
    %229 = vmatmul.mubr.bf16.gmra.mrb[0].mxu0 %v119
    %v230 = vpop.f32.mrb[0].mxu0
    %v231 = vadd.f32 0.0, %v230
    %v232 = vpop.f32.mrb[0].mxu0
    %v233 = vpop.f32.mrb[0].mxu0
    %v234 = vadd.f32 0.0, %v233
    %v235 = vpop.f32.mrb[0].mxu0
    %236 = vdwg.mxu0
    %v237 = vadd.f32 %v68, %v207
    %v238 = vadd.f32 %v69, %v210
    %v239 = vadd.f32 %v70, %v215
    %v240 = vadd.f32 %v71, %v218
    %v241 = vadd.f32 %v72, %v223
    %v242 = vadd.f32 %v73, %v226
    %v243 = vadd.f32 %v74, %v231
    %v244 = vadd.f32 %v75, %v234
    %vm245 = vcmask 64512
    %246 = vst.msk [vmem:[#allocation2] sm:$0xff] %vm245, %v237
    %247 = vst.msk [vmem:[#allocation2 + $0x8] sm:$0xff] %vm245, %v238
    %248 = vst.msk [vmem:[#allocation2 + $0x10] sm:$0xff] %vm245, %v239
    %249 = vst.msk [vmem:[#allocation2 + $0x18] sm:$0xff] %vm245, %v240
    %250 = vst.msk [vmem:[#allocation2 + $0x20] sm:$0xff] %vm245, %v241
    %251 = vst.msk [vmem:[#allocation2 + $0x28] sm:$0xff] %vm245, %v242
    %252 = vst.msk [vmem:[#allocation2 + $0x30] sm:$0xff] %vm245, %v243
    %253 = vst.msk [vmem:[#allocation2 + $0x38] sm:$0xff] %vm245, %v244
    // Predicated region
    $region30: #{residual_block_forward.2} parent=1 // pred_check
      %p254 = pneg %p55
    $region31: #{residual_block_forward.2} parent=1 // pred_check_branch
      %256 = sbr.rel (%p254) target = $region33
    $region32: #{residual_block_forward.2} parent=1 // pred_region
      %v257 = vld [vmem:[#allocation2] sm:$0xff]
      %v258 = vld [vmem:[#allocation2 + $0x8] sm:$0xff]
      %v259 = vld [vmem:[#allocation2 + $0x10] sm:$0xff]
      %v260 = vld [vmem:[#allocation2 + $0x18] sm:$0xff]
      %v261 = vld [vmem:[#allocation2 + $0x20] sm:$0xff]
      %v262 = vld [vmem:[#allocation2 + $0x28] sm:$0xff]
      %v263 = vld [vmem:[#allocation2 + $0x30] sm:$0xff]
      %v264 = vld [vmem:[#allocation2 + $0x38] sm:$0xff]
      %v265 = vld [vmem:[#allocation8] sm:$0x1]
      %v267 = vlaneseq
      %v268 = vshrl.u32 %v267, 7
      %v269 = vsub.s32 0, %v268
      %v270 = vrot.slane %v265, %v269
      %v272 = vadd.f32 %v257, %v270
      %v273 = vadd.f32 %v258, %v270
      %v274 = vadd.f32 %v259, %v270
      %v275 = vadd.f32 %v260, %v270
      %v276 = vadd.f32 %v261, %v270
      %v277 = vadd.f32 %v262, %v270
      %v278 = vadd.f32 %v263, %v270
      %v279 = vadd.f32 %v264, %v270
      %v280 = vmax.f32 %v272, 0.0
      %v281 = vmax.f32 %v273, 0.0
      %v282 = vmax.f32 %v274, 0.0
      %v283 = vmax.f32 %v275, 0.0
      %v284 = vmax.f32 %v276, 0.0
      %v285 = vmax.f32 %v277, 0.0
      %v286 = vmax.f32 %v278, 0.0
      %v287 = vmax.f32 %v279, 0.0
      %v288 = vpack.c.bf16 %v281, %v280
      %v289 = vpack.c.bf16 %v283, %v282
      %v290 = vpack.c.bf16 %v285, %v284
      %v291 = vpack.c.bf16 %v287, %v286
      %v296 = vunpack.c.l.b16 %v288
      %v297 = vunpack.c.h.b16 %v288
      %v298 = vunpack.c.l.b16 %v289
      %v299 = vunpack.c.h.b16 %v289
      %v300 = vunpack.c.l.b16 %v290
      %v301 = vunpack.c.h.b16 %v290
      %v302 = vunpack.c.l.b16 %v291
      %v303 = vunpack.c.h.b16 %v291
      %v304 = vpack.c.b16 %v296, %v296
      %v305 = vpack.c.b16 %v297, %v297
      %v306 = vpack.c.b16 %v298, %v298
      %v307 = vpack.c.b16 %v299, %v299
      %v308 = vpack.c.b16 %v300, %v300
      %v309 = vpack.c.b16 %v301, %v301
      %v310 = vpack.c.b16 %v302, %v302
      %v311 = vpack.c.b16 %v303, %v303
      %vm320 = vcmask 60416
      %321 = vst.msk [vmem:[#allocation9] sm:$0xf] %vm320, %v304
      %322 = vst.msk [vmem:[#allocation9 + $0x4] sm:$0xf] %vm320, %v305
      %323 = vst.msk [vmem:[#allocation9 + $0x8] sm:$0xf] %vm320, %v306
      %324 = vst.msk [vmem:[#allocation9 + $0xc] sm:$0xf] %vm320, %v307
      %325 = vst.msk [vmem:[#allocation9 + $0x10] sm:$0xf] %vm320, %v308
      %326 = vst.msk [vmem:[#allocation9 + $0x14] sm:$0xf] %vm320, %v309
      %327 = vst.msk [vmem:[#allocation9 + $0x18] sm:$0xf] %vm320, %v310
      %328 = vst.msk [vmem:[#allocation9 + $0x1c] sm:$0xf] %vm320, %v311
    $region33: #{residual_block_forward.2} parent=1 // pred_fallthru
      _
    // Predicated region
    $region34: #{residual_block_forward.2} parent=1 // pred_check
      _
    $region35: #{residual_block_forward.2} parent=1 // pred_check_branch
      %330 = sbr.rel (0) target = $region37
    $region36: #{residual_block_forward.2} parent=1 // pred_region
      %s332 = ssub.s32 512, 512
      %333 = vsyncadd [#allocation5], %s332
      %s334 = sshll.u32 [#allocation9], 4
      %s335 = int_to_ptr.vmem [resolvable:$true] %s334
      %340 = dma.vmem_to_hbm [thread:$0]  %s335, 512, %s3, [#allocation5], 64, 64, 4
    $region37: #{residual_block_forward.2} parent=1 // pred_fallthru
      _
    // Predicated region
    $region38: #{residual_block_forward.2} parent=1 // pred_check
      _
    $region39: #{residual_block_forward.2} parent=1 // pred_check_branch
      %342 = sbr.rel (0) target = $region41
    $region40: #{residual_block_forward.2} parent=1 // pred_region
      %343 = dma.done [#allocation5], 512
    $region41: #{residual_block_forward.2} parent=1 // pred_fallthru
      _
    %344 = vsyncpa [#allocation4], 1
    %345 = vsyncpa [#allocation7], 1
    %346 = vsyncpa [#allocation5], 1

// kernel: residual_block_forward.3
$region0: #{residual_block_forward.3}
  #allocation0 [shape = 'u32[]', space=smem, size = 0x4, offset = 0x4, fixed_abs, tag = 'smem constant byte address 0x4 - core index']
  #allocation1 [shape = 'u32[144,128]{1,0:T(1,128)}', space=vmem, size = 0x12000, scoped, tag = 'internal scratch']
  #allocation2 [shape = 'f32[64,8]{1,0:T(8,128)}', space=vmem, size = 0x8000, scoped, tag = 'scratch operand']
  %s0 = inlined_call_operand.hbm [shape: bf16[64,256], index: 0, kind: input, shape index: {}]
  %s1 = inlined_call_operand.hbm [shape: bf16[256,8], index: 1, kind: input, shape index: {}]
  %s2 = inlined_call_operand.hbm [shape: bf16[64,128], index: 2, kind: input, shape index: {}]
  %s3 = inlined_call_operand.hbm [shape: bf16[128,8], index: 3, kind: input, shape index: {}]
  %s4 = inlined_call_operand.hbm [shape: f32[1,8], index: 4, kind: input, shape index: {}]
  %s5 = inlined_call_operand.hbm [shape: f32[64,8], index: 5, kind: output, shape index: {}]
  %s6 = sld [smem:[#allocation0]]
  $region58: #{residual_block_forward.3} parent=0
    _
  %s8 = ssub.s32 1, %s6
  %s9 = scalar_select 0, %s8, %s6
  $region1: #{residual_block_forward.3} parent=0
    #allocation3 [shape = 'u8[32768]{0}', space=vmem, size = 0x8000, scoped, tag = 'input window, operand 0, single buffered']
    #allocation4 [shape = 's32[1]{0}', space=sflag, size = 0x4, scoped, tag = 'scoped memory for residual_block_forward.3']
    #allocation5 [shape = 's32[1]{0}', space=sflag, size = 0x4, scoped, tag = 'scoped memory for residual_block_forward.3']
    #allocation6 [shape = 'u8[65536]{0}', space=vmem, size = 0x10000, scoped, tag = 'input window, operand 1, single buffered']
    #allocation7 [shape = 's32[1]{0}', space=sflag, size = 0x4, scoped, tag = 'scoped memory for residual_block_forward.3']
    #allocation8 [shape = 'u8[16384]{0}', space=vmem, size = 0x4000, scoped, tag = 'input window, operand 2, single buffered']
    #allocation9 [shape = 'u8[32768]{0}', space=vmem, size = 0x8000, scoped, tag = 'input window, operand 3, single buffered']
    #allocation10 [shape = 's32[1]{0}', space=sflag, size = 0x4, scoped, tag = 'scoped memory for residual_block_forward.3']
    #allocation11 [shape = 'u8[512]{0}', space=vmem, size = 0x400, scoped, tag = 'input window, operand 4, single buffered']
    #allocation12 [shape = 'u8[32768]{0}', space=vmem, size = 0x8000, scoped, tag = 'output window, operand 0, single buffered']
    %10 = vsyncpa [#allocation4], 0
    %11 = vsyncpa [#allocation7], 0
    %12 = vsyncpa [#allocation10], 0
    %13 = vsyncpa [#allocation5], 0
    // Predicated region
    $region2: #{residual_block_forward.3} parent=1 // pred_check
      _
    $region3: #{residual_block_forward.3} parent=1 // pred_check_branch
      %15 = sbr.rel (0) target = $region5
    $region4: #{residual_block_forward.3} parent=1 // pred_region
      %s17 = ssub.s32 1024, 1024
      %18 = vsyncadd [#allocation4], %s17
      %s19 = sshll.u32 [#allocation3], 4
      %s20 = int_to_ptr.vmem [resolvable:$true] %s19
      %25 = dma.hbm_to_vmem [thread:$0]  %s0, 1024, %s20, [#allocation4], 128, 128, 8
    $region5: #{residual_block_forward.3} parent=1 // pred_fallthru
      _
    // Predicated region
    $region6: #{residual_block_forward.3} parent=1 // pred_check
      _
    $region7: #{residual_block_forward.3} parent=1 // pred_check_branch
      %27 = sbr.rel (0) target = $region9
    $region8: #{residual_block_forward.3} parent=1 // pred_region
      %s29 = ssub.s32 2048, 2048
      %30 = vsyncadd [#allocation7], %s29
      %s31 = sshll.u32 [#allocation6], 4
      %s32 = int_to_ptr.vmem [resolvable:$true] %s31
      %37 = dma.hbm_to_vmem [thread:$0]  %s1, 2048, %s32, [#allocation7], 64, 64, 4
    $region9: #{residual_block_forward.3} parent=1 // pred_fallthru
      _
    // Predicated region
    $region10: #{residual_block_forward.3} parent=1 // pred_check
      _
    $region11: #{residual_block_forward.3} parent=1 // pred_check_branch
      %39 = sbr.rel (0) target = $region13
    $region12: #{residual_block_forward.3} parent=1 // pred_region
      %s41 = ssub.s32 512, 512
      %42 = vsyncadd [#allocation7], %s41
      %s43 = sshll.u32 [#allocation8], 4
      %s44 = int_to_ptr.vmem [resolvable:$true] %s43
      %49 = dma.hbm_to_vmem [thread:$0]  %s2, 512, %s44, [#allocation7], 64, 64, 4
    $region13: #{residual_block_forward.3} parent=1 // pred_fallthru
      _
    // Predicated region
    $region14: #{residual_block_forward.3} parent=1 // pred_check
      _
    $region15: #{residual_block_forward.3} parent=1 // pred_check_branch
      %51 = sbr.rel (0) target = $region17
    $region16: #{residual_block_forward.3} parent=1 // pred_region
      %s53 = ssub.s32 1024, 1024
      %54 = vsyncadd [#allocation10], %s53
      %s55 = sshll.u32 [#allocation9], 4
      %s56 = int_to_ptr.vmem [resolvable:$true] %s55
      %61 = dma.hbm_to_vmem [thread:$0]  %s3, 1024, %s56, [#allocation10], 64, 64, 4
    $region17: #{residual_block_forward.3} parent=1 // pred_fallthru
      _
    // Predicated region
    $region18: #{residual_block_forward.3} parent=1 // pred_check
      _
    $region19: #{residual_block_forward.3} parent=1 // pred_check_branch
      %63 = sbr.rel (0) target = $region21
    $region20: #{residual_block_forward.3} parent=1 // pred_region
      %s65 = ssub.s32 16, 16
      %66 = vsyncadd [#allocation10], %s65
      %s68 = sshll.u32 [#allocation11], 4
      %s69 = int_to_ptr.vmem [resolvable:$true] %s68
      %71 = dma.hbm_to_vmem [thread:$0]  %s4, 16, %s69, [#allocation10]
    $region21: #{residual_block_forward.3} parent=1 // pred_fallthru
      _
    // Predicated region
    $region22: #{residual_block_forward.3} parent=1 // pred_check
      _
    $region23: #{residual_block_forward.3} parent=1 // pred_check_branch
      %73 = sbr.rel (0) target = $region25
    $region24: #{residual_block_forward.3} parent=1 // pred_region
      %74 = dma.done [#allocation4], 1024
    $region25: #{residual_block_forward.3} parent=1 // pred_fallthru
      _
    // Predicated region
    $region26: #{residual_block_forward.3} parent=1 // pred_check
      _
    $region27: #{residual_block_forward.3} parent=1 // pred_check_branch
      %76 = sbr.rel (0) target = $region29
    $region28: #{residual_block_forward.3} parent=1 // pred_region
      %77 = dma.done [#allocation7], 2048
    $region29: #{residual_block_forward.3} parent=1 // pred_fallthru
      _
    // Predicated region
    $region30: #{residual_block_forward.3} parent=1 // pred_check
      _
    $region31: #{residual_block_forward.3} parent=1 // pred_check_branch
      %79 = sbr.rel (0) target = $region33
    $region32: #{residual_block_forward.3} parent=1 // pred_region
      %80 = dma.done [#allocation7], 512
    $region33: #{residual_block_forward.3} parent=1 // pred_fallthru
      _
    // Predicated region
    $region34: #{residual_block_forward.3} parent=1 // pred_check
      _
    $region35: #{residual_block_forward.3} parent=1 // pred_check_branch
      %82 = sbr.rel (0) target = $region37
    $region36: #{residual_block_forward.3} parent=1 // pred_region
      %83 = dma.done [#allocation10], 1024
    $region37: #{residual_block_forward.3} parent=1 // pred_fallthru
      _
    // Predicated region
    $region38: #{residual_block_forward.3} parent=1 // pred_check
      _
    $region39: #{residual_block_forward.3} parent=1 // pred_check_branch
      %85 = sbr.rel (0) target = $region41
    $region40: #{residual_block_forward.3} parent=1 // pred_region
      %86 = dma.done [#allocation10], 16
    $region41: #{residual_block_forward.3} parent=1 // pred_fallthru
      _
    %p88 = scmp.eq.s32.totalorder 0, 0
    // Predicated region
    $region42: #{residual_block_forward.3} parent=1 // pred_check
      %p89 = pneg %p88
    $region43: #{residual_block_forward.3} parent=1 // pred_check_branch
      %91 = sbr.rel (%p89) target = $region45
    $region44: #{residual_block_forward.3} parent=1 // pred_region
      %v92 = vld [vmem:[#allocation8] sm:$0xf]
      %v93 = vld [vmem:[#allocation8 + $0x4] sm:$0xf]
      %v94 = vld [vmem:[#allocation8 + $0x8] sm:$0xf]
      %v95 = vld [vmem:[#allocation8 + $0xc] sm:$0xf]
      %v96 = vld [vmem:[#allocation8 + $0x10] sm:$0xf]
      %v97 = vld [vmem:[#allocation8 + $0x14] sm:$0xf]
      %v98 = vld [vmem:[#allocation8 + $0x18] sm:$0xf]
      %v99 = vld [vmem:[#allocation8 + $0x1c] sm:$0xf]
      %v100 = vld [vmem:[#allocation9] sm:$0xf]
      %v101 = vld [vmem:[#allocation9 + $0x4] sm:$0xf]
      %v102 = vld [vmem:[#allocation9 + $0x8] sm:$0xf]
      %v103 = vld [vmem:[#allocation9 + $0xc] sm:$0xf]
      %v104 = vld [vmem:[#allocation9 + $0x10] sm:$0xf]
      %v105 = vld [vmem:[#allocation9 + $0x14] sm:$0xf]
      %v106 = vld [vmem:[#allocation9 + $0x18] sm:$0xf]
      %v107 = vld [vmem:[#allocation9 + $0x1c] sm:$0xf]
      %v108 = vld [vmem:[#allocation9 + $0x20] sm:$0xf]
      %v109 = vld [vmem:[#allocation9 + $0x24] sm:$0xf]
      %v110 = vld [vmem:[#allocation9 + $0x28] sm:$0xf]
      %v111 = vld [vmem:[#allocation9 + $0x2c] sm:$0xf]
      %v112 = vld [vmem:[#allocation9 + $0x30] sm:$0xf]
      %v113 = vld [vmem:[#allocation9 + $0x34] sm:$0xf]
      %v114 = vld [vmem:[#allocation9 + $0x38] sm:$0xf]
      %v115 = vld [vmem:[#allocation9 + $0x3c] sm:$0xf]
      %v124 = vunpack.c.l.b16 %v92
      %v125 = vunpack.c.l.b16 %v93
      %v126 = vunpack.c.l.b16 %v94
      %v127 = vunpack.c.l.b16 %v95
      %v128 = vunpack.c.l.b16 %v96
      %v129 = vunpack.c.l.b16 %v97
      %v130 = vunpack.c.l.b16 %v98
      %v131 = vunpack.c.l.b16 %v99
      %v132 = vpack.c.b16 %v125, %v124
      %v133 = vpack.c.b16 %v127, %v126
      %v134 = vpack.c.b16 %v129, %v128
      %v135 = vpack.c.b16 %v131, %v130
      %v156 = vunpack.c.l.b16 %v100
      %v157 = vunpack.c.l.b16 %v101
      %v158 = vunpack.c.l.b16 %v102
      %v159 = vunpack.c.l.b16 %v103
      %v160 = vunpack.c.l.b16 %v104
      %v161 = vunpack.c.l.b16 %v105
      %v162 = vunpack.c.l.b16 %v106
      %v163 = vunpack.c.l.b16 %v107
      %v164 = vunpack.c.l.b16 %v108
      %v165 = vunpack.c.l.b16 %v109
      %v166 = vunpack.c.l.b16 %v110
      %v167 = vunpack.c.l.b16 %v111
      %v168 = vunpack.c.l.b16 %v112
      %v169 = vunpack.c.l.b16 %v113
      %v170 = vunpack.c.l.b16 %v114
      %v171 = vunpack.c.l.b16 %v115
      %v172 = vpack.c.b16 %v157, %v156
      %v173 = vpack.c.b16 %v159, %v158
      %v174 = vpack.c.b16 %v161, %v160
      %v175 = vpack.c.b16 %v163, %v162
      %v176 = vpack.c.b16 %v165, %v164
      %v177 = vpack.c.b16 %v167, %v166
      %v178 = vpack.c.b16 %v169, %v168
      %v179 = vpack.c.b16 %v171, %v170
      %188 = vmatprep.subr.bf16.mxu0 0
      %189 = vmatpush1.bf16.msra.mxu0 %v172
      %190 = vmatprep.subr.bf16.mxu0 0
      %191 = vmatpush1.bf16.msra.mxu0 %v173
      %192 = vmatprep.subr.bf16.mxu0 0
      %193 = vmatpush1.bf16.msra.mxu0 %v174
      %194 = vmatprep.subr.bf16.mxu0 0
      %195 = vmatpush1.bf16.msra.mxu0 %v175
      %196 = vmatprep.subr.bf16.mxu0 0
      %197 = vmatpush1.bf16.msra.mxu0 %v176
      %198 = vmatprep.subr.bf16.mxu0 0
      %199 = vmatpush1.bf16.msra.mxu0 %v177
      %200 = vmatprep.subr.bf16.mxu0 0
      %201 = vmatpush1.bf16.msra.mxu0 %v178
      %202 = vmatprep.subr.bf16.mxu0 0
      %203 = vmatpush1.bf16.msra.mxu0 %v179
      %204 = vmatprep.subr.bf16.mxu0 0
      %205 = vmatpush1.bf16.msra.mxu0 0
      %206 = vmatprep.subr.bf16.mxu0 0
      %207 = vmatpush1.bf16.msra.mxu0 0
      %208 = vmatprep.subr.bf16.mxu0 0
      %209 = vmatpush1.bf16.msra.mxu0 0
      %210 = vmatprep.subr.bf16.mxu0 0
      %211 = vmatpush1.bf16.msra.mxu0 0
      %212 = vmatprep.subr.bf16.mxu0 0
      %213 = vmatpush1.bf16.msra.mxu0 0
      %214 = vmatprep.subr.bf16.mxu0 0
      %215 = vmatpush1.bf16.msra.mxu0 0
      %216 = vmatprep.subr.bf16.mxu0 0
      %217 = vmatpush1.bf16.msra.mxu0 0
      %218 = vmatprep.subr.bf16.mxu0 0
      %219 = vmatpush1.bf16.msra.mxu0 0
      %220 = vmatprep.mubr.bf16.mxu0 0
      %221 = vmatmul.mubr.bf16.gmra.mrb[0].mxu0 %v132
      %v222 = vpop.f32.mrb[0].mxu0
      %v223 = vadd.f32 0.0, %v222
      %v224 = vpop.f32.mrb[0].mxu0
      %v225 = vpop.f32.mrb[0].mxu0
      %v226 = vadd.f32 0.0, %v225
      %v227 = vpop.f32.mrb[0].mxu0
      %228 = vmatprep.mubr.bf16.mxu0 0
      %229 = vmatmul.mubr.bf16.gmra.mrb[0].mxu0 %v133
      %v230 = vpop.f32.mrb[0].mxu0
      %v231 = vadd.f32 0.0, %v230
      %v232 = vpop.f32.mrb[0].mxu0
      %v233 = vpop.f32.mrb[0].mxu0
      %v234 = vadd.f32 0.0, %v233
      %v235 = vpop.f32.mrb[0].mxu0
      %236 = vmatprep.mubr.bf16.mxu0 0
      %237 = vmatmul.mubr.bf16.gmra.mrb[0].mxu0 %v134
      %v238 = vpop.f32.mrb[0].mxu0
      %v239 = vadd.f32 0.0, %v238
      %v240 = vpop.f32.mrb[0].mxu0
      %v241 = vpop.f32.mrb[0].mxu0
      %v242 = vadd.f32 0.0, %v241
      %v243 = vpop.f32.mrb[0].mxu0
      %244 = vmatprep.mubr.bf16.mxu0 0
      %245 = vmatmul.mubr.bf16.gmra.mrb[0].mxu0 %v135
      %v246 = vpop.f32.mrb[0].mxu0
      %v247 = vadd.f32 0.0, %v246
      %v248 = vpop.f32.mrb[0].mxu0
      %v249 = vpop.f32.mrb[0].mxu0
      %v250 = vadd.f32 0.0, %v249
      %v251 = vpop.f32.mrb[0].mxu0
      %252 = vdwg.mxu0
      %vm253 = vcmask 64512
      %254 = vst.msk [vmem:[#allocation2] sm:$0xff] %vm253, %v223
      %255 = vst.msk [vmem:[#allocation2 + $0x8] sm:$0xff] %vm253, %v226
      %256 = vst.msk [vmem:[#allocation2 + $0x10] sm:$0xff] %vm253, %v231
      %257 = vst.msk [vmem:[#allocation2 + $0x18] sm:$0xff] %vm253, %v234
      %258 = vst.msk [vmem:[#allocation2 + $0x20] sm:$0xff] %vm253, %v239
      %259 = vst.msk [vmem:[#allocation2 + $0x28] sm:$0xff] %vm253, %v242
      %260 = vst.msk [vmem:[#allocation2 + $0x30] sm:$0xff] %vm253, %v247
      %261 = vst.msk [vmem:[#allocation2 + $0x38] sm:$0xff] %vm253, %v250
    $region45: #{residual_block_forward.3} parent=1 // pred_fallthru
      _
    %v262 = vld [vmem:[#allocation2] sm:$0xff]
    %v263 = vld [vmem:[#allocation2 + $0x8] sm:$0xff]
    %v264 = vld [vmem:[#allocation2 + $0x10] sm:$0xff]
    %v265 = vld [vmem:[#allocation2 + $0x18] sm:$0xff]
    %v266 = vld [vmem:[#allocation2 + $0x20] sm:$0xff]
    %v267 = vld [vmem:[#allocation2 + $0x28] sm:$0xff]
    %v268 = vld [vmem:[#allocation2 + $0x30] sm:$0xff]
    %v269 = vld [vmem:[#allocation2 + $0x38] sm:$0xff]
    %v270 = vld [vmem:[#allocation3] sm:$0xff]
    %v271 = vld [vmem:[#allocation3 + $0x8] sm:$0xff]
    %v272 = vld [vmem:[#allocation3 + $0x10] sm:$0xff]
    %v273 = vld [vmem:[#allocation3 + $0x18] sm:$0xff]
    %v274 = vld [vmem:[#allocation3 + $0x20] sm:$0xff]
    %v275 = vld [vmem:[#allocation3 + $0x28] sm:$0xff]
    %v276 = vld [vmem:[#allocation3 + $0x30] sm:$0xff]
    %v277 = vld [vmem:[#allocation3 + $0x38] sm:$0xff]
    %v278 = vld [vmem:[#allocation6] sm:$0xf]
    %v279 = vld [vmem:[#allocation6 + $0x4] sm:$0xf]
    %v280 = vld [vmem:[#allocation6 + $0x8] sm:$0xf]
    %v281 = vld [vmem:[#allocation6 + $0xc] sm:$0xf]
    %v282 = vld [vmem:[#allocation6 + $0x10] sm:$0xf]
    %v283 = vld [vmem:[#allocation6 + $0x14] sm:$0xf]
    %v284 = vld [vmem:[#allocation6 + $0x18] sm:$0xf]
    %v285 = vld [vmem:[#allocation6 + $0x1c] sm:$0xf]
    %v286 = vld [vmem:[#allocation6 + $0x20] sm:$0xf]
    %v287 = vld [vmem:[#allocation6 + $0x24] sm:$0xf]
    %v288 = vld [vmem:[#allocation6 + $0x28] sm:$0xf]
    %v289 = vld [vmem:[#allocation6 + $0x2c] sm:$0xf]
    %v290 = vld [vmem:[#allocation6 + $0x30] sm:$0xf]
    %v291 = vld [vmem:[#allocation6 + $0x34] sm:$0xf]
    %v292 = vld [vmem:[#allocation6 + $0x38] sm:$0xf]
    %v293 = vld [vmem:[#allocation6 + $0x3c] sm:$0xf]
    %v294 = vld [vmem:[#allocation6 + $0x40] sm:$0xf]
    %v295 = vld [vmem:[#allocation6 + $0x44] sm:$0xf]
    %v296 = vld [vmem:[#allocation6 + $0x48] sm:$0xf]
    %v297 = vld [vmem:[#allocation6 + $0x4c] sm:$0xf]
    %v298 = vld [vmem:[#allocation6 + $0x50] sm:$0xf]
    %v299 = vld [vmem:[#allocation6 + $0x54] sm:$0xf]
    %v300 = vld [vmem:[#allocation6 + $0x58] sm:$0xf]
    %v301 = vld [vmem:[#allocation6 + $0x5c] sm:$0xf]
    %v302 = vld [vmem:[#allocation6 + $0x60] sm:$0xf]
    %v303 = vld [vmem:[#allocation6 + $0x64] sm:$0xf]
    %v304 = vld [vmem:[#allocation6 + $0x68] sm:$0xf]
    %v305 = vld [vmem:[#allocation6 + $0x6c] sm:$0xf]
    %v306 = vld [vmem:[#allocation6 + $0x70] sm:$0xf]
    %v307 = vld [vmem:[#allocation6 + $0x74] sm:$0xf]
    %v308 = vld [vmem:[#allocation6 + $0x78] sm:$0xf]
    %v309 = vld [vmem:[#allocation6 + $0x7c] sm:$0xf]
    %v318 = vunpack.c.l.b16 %v270
    %v319 = vunpack.c.h.b16 %v270
    %v320 = vunpack.c.l.b16 %v271
    %v321 = vunpack.c.h.b16 %v271
    %v322 = vunpack.c.l.b16 %v272
    %v323 = vunpack.c.h.b16 %v272
    %v324 = vunpack.c.l.b16 %v273
    %v325 = vunpack.c.h.b16 %v273
    %v326 = vunpack.c.l.b16 %v274
    %v327 = vunpack.c.h.b16 %v274
    %v328 = vunpack.c.l.b16 %v275
    %v329 = vunpack.c.h.b16 %v275
    %v330 = vunpack.c.l.b16 %v276
    %v331 = vunpack.c.h.b16 %v276
    %v332 = vunpack.c.l.b16 %v277
    %v333 = vunpack.c.h.b16 %v277
    %v334 = vpack.c.b16 %v320, %v318
    %v335 = vpack.c.b16 %v321, %v319
    %v336 = vpack.c.b16 %v324, %v322
    %v337 = vpack.c.b16 %v325, %v323
    %v338 = vpack.c.b16 %v328, %v326
    %v339 = vpack.c.b16 %v329, %v327
    %v340 = vpack.c.b16 %v332, %v330
    %v341 = vpack.c.b16 %v333, %v331
    %v382 = vunpack.c.l.b16 %v278
    %v383 = vunpack.c.l.b16 %v279
    %v384 = vunpack.c.l.b16 %v280
    %v385 = vunpack.c.l.b16 %v281
    %v386 = vunpack.c.l.b16 %v282
    %v387 = vunpack.c.l.b16 %v283
    %v388 = vunpack.c.l.b16 %v284
    %v389 = vunpack.c.l.b16 %v285
    %v390 = vunpack.c.l.b16 %v286
    %v391 = vunpack.c.l.b16 %v287
    %v392 = vunpack.c.l.b16 %v288
    %v393 = vunpack.c.l.b16 %v289
    %v394 = vunpack.c.l.b16 %v290
    %v395 = vunpack.c.l.b16 %v291
    %v396 = vunpack.c.l.b16 %v292
    %v397 = vunpack.c.l.b16 %v293
    %v398 = vunpack.c.l.b16 %v294
    %v399 = vunpack.c.l.b16 %v295
    %v400 = vunpack.c.l.b16 %v296
    %v401 = vunpack.c.l.b16 %v297
    %v402 = vunpack.c.l.b16 %v298
    %v403 = vunpack.c.l.b16 %v299
    %v404 = vunpack.c.l.b16 %v300
    %v405 = vunpack.c.l.b16 %v301
    %v406 = vunpack.c.l.b16 %v302
    %v407 = vunpack.c.l.b16 %v303
    %v408 = vunpack.c.l.b16 %v304
    %v409 = vunpack.c.l.b16 %v305
    %v410 = vunpack.c.l.b16 %v306
    %v411 = vunpack.c.l.b16 %v307
    %v412 = vunpack.c.l.b16 %v308
    %v413 = vunpack.c.l.b16 %v309
    %v414 = vpack.c.b16 %v383, %v382
    %v415 = vpack.c.b16 %v385, %v384
    %v416 = vpack.c.b16 %v387, %v386
    %v417 = vpack.c.b16 %v389, %v388
    %v418 = vpack.c.b16 %v391, %v390
    %v419 = vpack.c.b16 %v393, %v392
    %v420 = vpack.c.b16 %v395, %v394
    %v421 = vpack.c.b16 %v397, %v396
    %v422 = vpack.c.b16 %v399, %v398
    %v423 = vpack.c.b16 %v401, %v400
    %v424 = vpack.c.b16 %v403, %v402
    %v425 = vpack.c.b16 %v405, %v404
    %v426 = vpack.c.b16 %v407, %v406
    %v427 = vpack.c.b16 %v409, %v408
    %v428 = vpack.c.b16 %v411, %v410
    %v429 = vpack.c.b16 %v413, %v412
    %446 = vmatprep.subr.bf16.mxu0 0
    %447 = vmatpush1.bf16.msra.mxu0 %v414
    %448 = vmatprep.subr.bf16.mxu0 0
    %449 = vmatpush1.bf16.msra.mxu0 %v415
    %450 = vmatprep.subr.bf16.mxu0 0
    %451 = vmatpush1.bf16.msra.mxu0 %v416
    %452 = vmatprep.subr.bf16.mxu0 0
    %453 = vmatpush1.bf16.msra.mxu0 %v417
    %454 = vmatprep.subr.bf16.mxu0 0
    %455 = vmatpush1.bf16.msra.mxu0 %v418
    %456 = vmatprep.subr.bf16.mxu0 0
    %457 = vmatpush1.bf16.msra.mxu0 %v419
    %458 = vmatprep.subr.bf16.mxu0 0
    %459 = vmatpush1.bf16.msra.mxu0 %v420
    %460 = vmatprep.subr.bf16.mxu0 0
    %461 = vmatpush1.bf16.msra.mxu0 %v421
    %462 = vmatprep.subr.bf16.mxu0 0
    %463 = vmatpush1.bf16.msra.mxu0 %v422
    %464 = vmatprep.subr.bf16.mxu0 0
    %465 = vmatpush1.bf16.msra.mxu0 %v423
    %466 = vmatprep.subr.bf16.mxu0 0
    %467 = vmatpush1.bf16.msra.mxu0 %v424
    %468 = vmatprep.subr.bf16.mxu0 0
    %469 = vmatpush1.bf16.msra.mxu0 %v425
    %470 = vmatprep.subr.bf16.mxu0 0
    %471 = vmatpush1.bf16.msra.mxu0 %v426
    %472 = vmatprep.subr.bf16.mxu0 0
    %473 = vmatpush1.bf16.msra.mxu0 %v427
    %474 = vmatprep.subr.bf16.mxu0 0
    %475 = vmatpush1.bf16.msra.mxu0 %v428
    %476 = vmatprep.subr.bf16.mxu0 0
    %477 = vmatpush1.bf16.msra.mxu0 %v429
    %478 = vmatprep.mubr.bf16.mxu0 %v335
    %479 = vmatmul.mubr.bf16.gmra.mrb[0].mxu0 %v334
    %v480 = vpop.f32.mrb[0].mxu0
    %v481 = vadd.f32 0.0, %v480
    %v482 = vpop.f32.mrb[0].mxu0
    %v483 = vpop.f32.mrb[0].mxu0
    %v484 = vadd.f32 0.0, %v483
    %v485 = vpop.f32.mrb[0].mxu0
    %486 = vmatprep.mubr.bf16.mxu0 %v337
    %487 = vmatmul.mubr.bf16.gmra.mrb[0].mxu0 %v336
    %v488 = vpop.f32.mrb[0].mxu0
    %v489 = vadd.f32 0.0, %v488
    %v490 = vpop.f32.mrb[0].mxu0
    %v491 = vpop.f32.mrb[0].mxu0
    %v492 = vadd.f32 0.0, %v491
    %v493 = vpop.f32.mrb[0].mxu0
    %494 = vmatprep.mubr.bf16.mxu0 %v339
    %495 = vmatmul.mubr.bf16.gmra.mrb[0].mxu0 %v338
    %v496 = vpop.f32.mrb[0].mxu0
    %v497 = vadd.f32 0.0, %v496
    %v498 = vpop.f32.mrb[0].mxu0
    %v499 = vpop.f32.mrb[0].mxu0
    %v500 = vadd.f32 0.0, %v499
    %v501 = vpop.f32.mrb[0].mxu0
    %502 = vmatprep.mubr.bf16.mxu0 %v341
    %503 = vmatmul.mubr.bf16.gmra.mrb[0].mxu0 %v340
    %v504 = vpop.f32.mrb[0].mxu0
    %v505 = vadd.f32 0.0, %v504
    %v506 = vpop.f32.mrb[0].mxu0
    %v507 = vpop.f32.mrb[0].mxu0
    %v508 = vadd.f32 0.0, %v507
    %v509 = vpop.f32.mrb[0].mxu0
    %510 = vdwg.mxu0
    %v511 = vadd.f32 %v262, %v481
    %v512 = vadd.f32 %v263, %v484
    %v513 = vadd.f32 %v264, %v489
    %v514 = vadd.f32 %v265, %v492
    %v515 = vadd.f32 %v266, %v497
    %v516 = vadd.f32 %v267, %v500
    %v517 = vadd.f32 %v268, %v505
    %v518 = vadd.f32 %v269, %v508
    %vm519 = vcmask 64512
    %520 = vst.msk [vmem:[#allocation2] sm:$0xff] %vm519, %v511
    %521 = vst.msk [vmem:[#allocation2 + $0x8] sm:$0xff] %vm519, %v512
    %522 = vst.msk [vmem:[#allocation2 + $0x10] sm:$0xff] %vm519, %v513
    %523 = vst.msk [vmem:[#allocation2 + $0x18] sm:$0xff] %vm519, %v514
    %524 = vst.msk [vmem:[#allocation2 + $0x20] sm:$0xff] %vm519, %v515
    %525 = vst.msk [vmem:[#allocation2 + $0x28] sm:$0xff] %vm519, %v516
    %526 = vst.msk [vmem:[#allocation2 + $0x30] sm:$0xff] %vm519, %v517
    %527 = vst.msk [vmem:[#allocation2 + $0x38] sm:$0xff] %vm519, %v518
    // Predicated region
    $region46: #{residual_block_forward.3} parent=1 // pred_check
      %p528 = pneg %p88
    $region47: #{residual_block_forward.3} parent=1 // pred_check_branch
      %530 = sbr.rel (%p528) target = $region49
    $region48: #{residual_block_forward.3} parent=1 // pred_region
      %v531 = vld [vmem:[#allocation2] sm:$0xff]
      %v532 = vld [vmem:[#allocation2 + $0x8] sm:$0xff]
      %v533 = vld [vmem:[#allocation2 + $0x10] sm:$0xff]
      %v534 = vld [vmem:[#allocation2 + $0x18] sm:$0xff]
      %v535 = vld [vmem:[#allocation2 + $0x20] sm:$0xff]
      %v536 = vld [vmem:[#allocation2 + $0x28] sm:$0xff]
      %v537 = vld [vmem:[#allocation2 + $0x30] sm:$0xff]
      %v538 = vld [vmem:[#allocation2 + $0x38] sm:$0xff]
      %v539 = vld [vmem:[#allocation11] sm:$0x1]
      %v541 = vlaneseq
      %v542 = vshrl.u32 %v541, 7
      %v543 = vsub.s32 0, %v542
      %v544 = vrot.slane %v539, %v543
      %v546 = vadd.f32 %v531, %v544
      %v547 = vadd.f32 %v532, %v544
      %v548 = vadd.f32 %v533, %v544
      %v549 = vadd.f32 %v534, %v544
      %v550 = vadd.f32 %v535, %v544
      %v551 = vadd.f32 %v536, %v544
      %v552 = vadd.f32 %v537, %v544
      %v553 = vadd.f32 %v538, %v544
      %v554 = vmax.f32 %v546, 0.0
      %v555 = vmax.f32 %v547, 0.0
      %v556 = vmax.f32 %v548, 0.0
      %v557 = vmax.f32 %v549, 0.0
      %v558 = vmax.f32 %v550, 0.0
      %v559 = vmax.f32 %v551, 0.0
      %v560 = vmax.f32 %v552, 0.0
      %v561 = vmax.f32 %v553, 0.0
      %562 = vst.msk [vmem:[#allocation12] sm:$0xff] %vm519, %v554
      %563 = vst.msk [vmem:[#allocation12 + $0x8] sm:$0xff] %vm519, %v555
      %564 = vst.msk [vmem:[#allocation12 + $0x10] sm:$0xff] %vm519, %v556
      %565 = vst.msk [vmem:[#allocation12 + $0x18] sm:$0xff] %vm519, %v557
      %566 = vst.msk [vmem:[#allocation12 + $0x20] sm:$0xff] %vm519, %v558
      %567 = vst.msk [vmem:[#allocation12 + $0x28] sm:$0xff] %vm519, %v559
      %568 = vst.msk [vmem:[#allocation12 + $0x30] sm:$0xff] %vm519, %v560
      %569 = vst.msk [vmem:[#allocation12 + $0x38] sm:$0xff] %vm519, %v561
    $region49: #{residual_block_forward.3} parent=1 // pred_fallthru
      _
    // Predicated region
    $region50: #{residual_block_forward.3} parent=1 // pred_check
      _
    $region51: #{residual_block_forward.3} parent=1 // pred_check_branch
      %571 = sbr.rel (0) target = $region53
    $region52: #{residual_block_forward.3} parent=1 // pred_region
      %s573 = ssub.s32 1024, 1024
      %574 = vsyncadd [#allocation5], %s573
      %s575 = sshll.u32 [#allocation12], 4
      %s576 = int_to_ptr.vmem [resolvable:$true] %s575
      %581 = dma.vmem_to_hbm [thread:$0]  %s576, 1024, %s5, [#allocation5], 128, 128, 8
    $region53: #{residual_block_forward.3} parent=1 // pred_fallthru
      _
    // Predicated region
    $region54: #{residual_block_forward.3} parent=1 // pred_check
      _
    $region55: #{residual_block_forward.3} parent=1 // pred_check_branch
      %583 = sbr.rel (0) target = $region57
    $region56: #{residual_block_forward.3} parent=1 // pred_region
      %584 = dma.done [#allocation5], 1024
    $region57: #{residual_block_forward.3} parent=1 // pred_fallthru
      _
    %585 = vsyncpa [#allocation4], 1
    %586 = vsyncpa [#allocation7], 1
    %587 = vsyncpa [#allocation10], 1
    %588 = vsyncpa [#allocation5], 1

</llo_original>
